<compile_context>
chip_gen: v5e
topology: v5e:2x2
jax: 0.10.0
libtpu: 0.0.40
codegen_flags: <defaults>
</compile_context>

<pallas_src>
import functools

import jax
import jax.numpy as jnp
from jax.experimental import pallas as pl
from jax.experimental.pallas import tpu as pltpu


def _round_up(x, m):
    return (x + m - 1) // m * m


def _spatial_attn_kernel(*refs, has_bias):
    if has_bias:
        bias_ref, xq_ref, xk_ref, o_ref = refs
    else:
        xq_ref, xk_ref, o_ref = refs
        bias_ref = None

    xq = xq_ref[0]            # (Cp, tq)   channels x query positions
    xk = xk_ref[0]            # (Cp, HWp)  channels x all key positions

    # G[p, q] = sum_c xq[c, p] * xk[c, q] — contract dim 0 of both operands,
    # no materialized transpose of the large lane-dense operand.
    g = jax.lax.dot_general(
        xq, xk,
        dimension_numbers=(((0,), (0,)), ((), ())),
        preferred_element_type=jnp.float32,
    )                          # (tq, HWp) f32

    if has_bias:
        # Precomputed additive key-column mask (0 valid / -1e30 padded):
        # a single broadcast add instead of iota+compare+select per step.
        g = g + bias_ref[...]

    # Row softmax over the full (lane-dense) key axis, entirely in VMEM.
    m = jnp.max(g, axis=-1, keepdims=True)
    e = jnp.exp(g - m)
    denom = jnp.sum(e, axis=-1, keepdims=True)

    # Per-row approx reciprocal on the EUP (tq values) instead of a full
    # (tq, HWp) divide; one Newton step (2 more ops on tq values) restores
    # ~f32 accuracy at negligible cost.  Remaining per-element work: 1 vmul.
    inv = pl.reciprocal(denom, approx=True)
    inv = inv * (2.0 - denom * inv)
    o_ref[0] = (e * inv).astype(o_ref.dtype)


def spatial_attention(x):
    """x: (B, C, H, W) float32 -> (B, H*W, H*W) float32 (softmax over last dim)."""
    B, C, H, W = x.shape
    HW = H * W

    # ---- Tile selection -------------------------------------------------
    # tq = query-row tile (multiple of 128).
    #  * cap at 128 for HW >= 2048 to bound the (tq, HWp) g/e live slabs,
    #  * drop to 128 if the grid would have < 2 steps (v7x megacore sharding).
    if HW >= 2048 or HW % 256 != 0:
        tq = 128
    else:
        tq = 256
    if tq > 128 and B * (_round_up(HW, tq) // tq) < 2:
        tq = 128

    HWp = _round_up(HW, tq)     # tq is 128 or 256 -> HWp is a multiple of 128
    Cp = _round_up(C, 8)        # zero-padded channels leave the Gram unchanged
    nq = HWp // tq
    has_bias = HWp != HW
    # NOTE: for very large C*HW one would add a key-tile grid axis with an
    # online-softmax accumulator; at realistic SpatialAttention scales the
    # full key slab (Cp x HWp f32, double-buffered) fits VMEM on all gens.

    x_flat = x.reshape(B, C, HW)
    if (Cp, HWp) != (C, HW):
        x_flat = jnp.pad(x_flat, ((0, 0), (0, Cp - C), (0, HWp - HW)))

    kernel = functools.partial(_spatial_attn_kernel, has_bias=has_bias)

    in_specs = []
    inputs = []
    if has_bias:
        bias = jnp.where(jnp.arange(HWp)[None, :] < HW, 0.0, -1e30)
        bias = bias.astype(jnp.float32)                      # (1, HWp)
        in_specs.append(pl.BlockSpec((1, HWp), lambda b, i: (0, 0)))
        inputs.append(bias)
    in_specs += [
        # query-position tile (channels x tq spatial positions)
        pl.BlockSpec((1, Cp, tq), lambda b, i: (b, 0, i)),
        # full key slab for this batch element (resident across the i axis)
        pl.BlockSpec((1, Cp, HWp), lambda b, i: (b, 0, 0)),
    ]
    inputs += [x_flat, x_flat]

    out_specs = pl.BlockSpec((1, tq, HWp), lambda b, i: (b, i, 0))

    # ---- VMEM sizing (fits v5e/v6e 128 MiB and v7x 64 MiB) ---------------
    elt = 4
    vmem_need = elt * (2 * Cp * tq + 2 * Cp * HWp + 2 * tq * HWp)  # dbl-buffered tiles
    if has_bias:
        vmem_need += elt * 2 * HWp
    vmem_need += elt * 3 * tq * HWp                                # g/e/staging live set
    vmem_limit = int(min(48 * 2**20, max(vmem_need + (4 << 20), 16 * 2**20)))

    cost = pl.CostEstimate(
        flops=2 * B * nq * tq * HWp * Cp + 6 * B * nq * tq * HWp,
        transcendentals=B * nq * tq * HWp,
        # key slab counted once per batch (resident across the i axis)
        bytes_accessed=B * elt * (Cp * HWp + nq * Cp * tq + nq * tq * HWp),
    )

    out = pl.pallas_call(
        kernel,
        out_shape=jax.ShapeDtypeStruct((B, HWp, HWp), jnp.float32),
        grid_spec=pltpu.PrefetchScalarGridSpec(
            num_scalar_prefetch=0,
            grid=(B, nq),
            in_specs=in_specs,
            out_specs=out_specs,
        ),
        compiler_params=pltpu.CompilerParams(
            dimension_semantics=("parallel", "parallel"),
            vmem_limit_bytes=vmem_limit,
        ),
        cost_estimate=cost,
    )(*inputs)

    if has_bias:
        # Only taken when HW is not a multiple of 128; otherwise no copy.
        out = out[:, :HW, :HW]
    return out


if __name__ == "__main__":
    key = jax.random.PRNGKey(0)
    B, C, H, W = 2, 4, 16, 16
    x = jax.random.normal(key, (B, C, H, W), dtype=jnp.float32)

    attn = spatial_attention(x)
    jax.block_until_ready(attn)

    # Reference check against plain JAX (mirrors the PyTorch forward).
    x1 = x.reshape(B, C, H * W)
    g_ref = jnp.einsum("bcp,bcq->bpq", x1, x1)
    ref = jax.nn.softmax(g_ref, axis=-1)
    assert attn.shape == (B, H * W, H * W)
    assert jnp.allclose(attn, ref, atol=5e-4, rtol=5e-4)

    print("KERNEL_OK")
</pallas_src>

<mosaic_0001>
module attributes {stable_mosaic.version = 11 : i64} {
  func.func @_spatial_attn_kernel(%arg0: i32, %arg1: i32, %arg2: memref<1x8x256xf32, #tpu.memory_space<vmem>>, %arg3: memref<1x8x256xf32, #tpu.memory_space<vmem>>, %arg4: memref<1x256x256xf32, #tpu.memory_space<vmem>>) attributes {dimension_semantics = [#tpu.dimension_semantics<parallel>, #tpu.dimension_semantics<parallel>], iteration_bounds = array<i64: 2, 1>, scalar_prefetch = 0 : i64, scratch_operands = 0 : i64, tpu.core_type = #tpu.core_type<tc>, window_params = [{transform_indices = @transform_0, window_bounds = array<i64: 1, 8, 256>}, {transform_indices = @transform_1, window_bounds = array<i64: 1, 8, 256>}, {transform_indices = @transform_2, window_bounds = array<i64: 1, 256, 256>}]} {
    %c0 = arith.constant 0 : index
    %c0_0 = arith.constant 0 : index
    %c0_1 = arith.constant 0 : index
    %0 = vector.load %arg2[%c0, %c0_0, %c0_1] : memref<1x8x256xf32, #tpu.memory_space<vmem>>, vector<1x8x256xf32>
    %1 = vector.shape_cast %0 : vector<1x8x256xf32> to vector<8x256xf32>
    %c0_2 = arith.constant 0 : index
    %c0_3 = arith.constant 0 : index
    %c0_4 = arith.constant 0 : index
    %2 = vector.load %arg3[%c0_2, %c0_3, %c0_4] : memref<1x8x256xf32, #tpu.memory_space<vmem>>, vector<1x8x256xf32>
    %3 = vector.shape_cast %2 : vector<1x8x256xf32> to vector<8x256xf32>
    %cst = arith.constant dense<0.000000e+00> : vector<256x256xf32>
    %4 = tpu.matmul %1, %3, %cst {dimension_numbers = #tpu.dot_dimension_numbers<[0], [0], [1], [1], [0, 1, 1, 1], [], []>} : vector<8x256xf32>, vector<8x256xf32>, vector<256x256xf32> -> vector<256x256xf32>
    %cst_5 = arith.constant dense<0xFF800000> : vector<256xf32>
    %5 = vector.multi_reduction <maximumf>, %4, %cst_5 [1] : vector<256x256xf32> to vector<256xf32>
    %6 = vector.shape_cast %5 : vector<256xf32> to vector<256x1xf32>
    %7 = vector.broadcast %6 : vector<256x1xf32> to vector<256x256xf32>
    %8 = arith.subf %4, %7 : vector<256x256xf32>
    %9 = math.exp %8 : vector<256x256xf32>
    %cst_6 = arith.constant dense<0.000000e+00> : vector<256xf32>
    %10 = vector.multi_reduction <add>, %9, %cst_6 [1] : vector<256x256xf32> to vector<256xf32>
    %11 = vector.shape_cast %10 : vector<256xf32> to vector<256x1xf32>
    %12 = tpu.reciprocal %11 {approx = true} : vector<256x1xf32> -> vector<256x1xf32>
    %13 = arith.mulf %11, %12 : vector<256x1xf32>
    %cst_7 = arith.constant 2.000000e+00 : f32
    %14 = vector.broadcast %cst_7 : f32 to vector<256x1xf32>
    %15 = arith.subf %14, %13 : vector<256x1xf32>
    %16 = arith.mulf %12, %15 : vector<256x1xf32>
    %17 = vector.broadcast %16 : vector<256x1xf32> to vector<256x256xf32>
    %18 = arith.mulf %9, %17 : vector<256x256xf32>
    %c0_8 = arith.constant 0 : index
    %c0_9 = arith.constant 0 : index
    %c0_10 = arith.constant 0 : index
    %19 = vector.load %arg4[%c0_8, %c0_9, %c0_10] : memref<1x256x256xf32, #tpu.memory_space<vmem>>, vector<1x256x256xf32>
    %20 = vector.shape_cast %19 : vector<1x256x256xf32> to vector<256x256xf32>
    %21 = vector.shape_cast %18 : vector<256x256xf32> to vector<1x256x256xf32>
    tpu.vector_store %arg4[%c0_8, %c0_9, %c0_10], %21 {strides = array<i32>} : memref<1x256x256xf32, #tpu.memory_space<vmem>>, vector<1x256x256xf32>,
    return
  }
  func.func @transform_0(%arg0: i32, %arg1: i32) -> (i32, i32, i32) {
    %c0_i32 = arith.constant 0 : i32
    %c0_i32_0 = arith.constant 0 : i32
    return %arg0, %c0_i32, %arg1 : i32, i32, i32
  }
  func.func @transform_1(%arg0: i32, %arg1: i32) -> (i32, i32, i32) {
    %c0_i32 = arith.constant 0 : i32
    %c0_i32_0 = arith.constant 0 : i32
    %c0_i32_1 = arith.constant 0 : i32
    return %arg0, %c0_i32, %c0_i32_0 : i32, i32, i32
  }
  func.func @transform_2(%arg0: i32, %arg1: i32) -> (i32, i32, i32) {
    %c0_i32 = arith.constant 0 : i32
    %c0_i32_0 = arith.constant 0 : i32
    return %arg0, %arg1, %c0_i32 : i32, i32, i32
  }
}

</mosaic_0001>

<llo_original>
// kernel: tpu_custom_call.1
$region0: #{tpu_custom_call.1}
  #allocation0 [shape = 'u32[]', space=smem, size = 0x4, offset = 0x4, fixed_abs, tag = 'smem constant byte address 0x4 - core index']
  #allocation1 [shape = 'u32[72,128]{1,0:T(1,128)}', space=vmem, size = 0x9000, scoped, tag = 'internal scratch']
  %s0 = inlined_call_operand.hbm [shape: f32[2,8,256], index: 0, kind: input, shape index: {}]
  %s1 = inlined_call_operand.hbm [shape: f32[2,8,256], index: 1, kind: input, shape index: {}]
  %s2 = inlined_call_operand.hbm [shape: f32[2,256,256], index: 2, kind: output, shape index: {}]
  %s3 = sld [smem:[#allocation0]]
  $region49: #{tpu_custom_call.1} parent=0
    _
  %s5 = ssub.s32 1, %s3
  %s6 = scalar_select 0, %s5, %s3
  $region1: #{tpu_custom_call.1} parent=0
    #allocation2 [shape = 'u8[16384]{0}', space=vmem, size = 0x4000, scoped, tag = 'input window, operand 0']
    #allocation3 [shape = 's32[2]{0}', space=sflag, size = 0x8, scoped, tag = 'scoped memory for tpu_custom_call.1']
    #allocation4 [shape = 's32[2]{0}', space=sflag, size = 0x8, scoped, tag = 'scoped memory for tpu_custom_call.1']
    #allocation5 [shape = 'u8[16384]{0}', space=vmem, size = 0x4000, scoped, tag = 'input window, operand 1']
    #allocation6 [shape = 's32[2]{0}', space=sflag, size = 0x8, scoped, tag = 'scoped memory for tpu_custom_call.1']
    #allocation7 [shape = 'u8[524288]{0}', space=vmem, size = 0x80000, scoped, tag = 'output window, operand 0']
    %7 = vsyncpa [#allocation3], 0
    %s8 = scalar_lea.sflag [#allocation3], 1
    %9 = vsyncpa %s8, 0
    %10 = vsyncpa [#allocation6], 0
    %s11 = scalar_lea.sflag [#allocation6], 1
    %12 = vsyncpa %s11, 0
    %13 = vsyncpa [#allocation4], 0
    %s14 = scalar_lea.sflag [#allocation4], 1
    %15 = vsyncpa %s14, 0
    loop: start=0, step=1, limit=4
    $region2: #{tpu_custom_call.1} parent=1 // loop_pre_header
      _
    $region3: #{tpu_custom_call.1} parent=1 // loop_header
      %s17 = sphi 0, %s21
      %p18 = scmp.ge.s32.totalorder %s17, 4
      %s24 = sphi 0, %s36
      %s25 = sphi 0, %s32
      %s26 = sphi 0, %s24
      %s27 = sphi 0, %s25
      %s28 = sphi 0, %s26
      %s29 = sphi 0, %s27
      %s41 = sphi 0, %s43
      %s44 = sphi 0, %s41
      %s45 = sphi 0, %s44
      %s61 = sphi 0, %s45
      %s67 = sphi 0, %s69
      %s70 = sphi 0, %s67
      %s71 = sphi 0, %s70
      %s87 = sphi 0, %s71
      %s95 = sphi 0, %s97
      %s98 = sphi 0, %s95
      %s99 = sphi 0, %s98
      %s115 = sphi 0, %s99
    $region4: #{tpu_custom_call.1} parent=1 // loop_header_branch
      %20 = sbr.rel (%p18) target = $region8
    $region5: #{tpu_custom_call.1} parent=1 // loop_body
      %s22 = ssub.s32 %s17, 1
      %s23 = ssub.s32 %s17, 2
      %s30 = sadd.s32 1, %s25
      %p31 = scmp.ge.s32.totalorder %s30, 1
      %s32 = scalar_select %p31, 0, %s30
      %s33 = sadd.s32 1, %s24
      %s34 = scalar_select %p31, %s33, %s24
      %p35 = scmp.ge.s32.totalorder %s34, 2
      %s36 = scalar_select %p35, 0, %s34
      %s37 = ssub.s32 %s24, %s36
      %s38 = ssub.s32 %s25, %s32
      %s39 = sor.u32 %s37, %s38
      %p40 = scmp.eq.s32.totalorder %s39, 0
      %s42 = sadd.s32 %s41, 1
      %s43 = scalar_select %p40, %s41, %s42
      %p46 = pneg %p40
      %p47 = scmp.eq.s32.totalorder %s17, 1
      %p48 = por %p46, %p47
      %p49 = scmp.ne.s32.totalorder %s41, %s44
      %p50 = scmp.eq.s32.totalorder %s17, 0
      %p51 = por %p49, %p50
      %p52 = scmp.ne.s32.totalorder %s41, %s44
      %p53 = scmp.eq.s32.totalorder %s22, 1
      %p54 = por %p52, %p53
      %p55 = scmp.ne.s32.totalorder %s44, %s45
      %p56 = scmp.eq.s32.totalorder %s22, 0
      %p57 = por %p55, %p56
      %p58 = scmp.ne.s32.totalorder %s44, %s45
      %p59 = scmp.eq.s32.totalorder %s23, 1
      %p60 = por %p58, %p59
      %p62 = scmp.ne.s32.totalorder %s45, %s61
      %p63 = scmp.eq.s32.totalorder %s23, 0
      %p64 = por %p62, %p63
      %s65 = ssub.s32 %s24, %s36
      %p66 = scmp.eq.s32.totalorder %s65, 0
      %s68 = sadd.s32 %s67, 1
      %s69 = scalar_select %p66, %s67, %s68
      %p72 = pneg %p66
      %p73 = scmp.eq.s32.totalorder %s17, 1
      %p74 = por %p72, %p73
      %p75 = scmp.ne.s32.totalorder %s67, %s70
      %p76 = scmp.eq.s32.totalorder %s17, 0
      %p77 = por %p75, %p76
      %p78 = scmp.ne.s32.totalorder %s67, %s70
      %p79 = scmp.eq.s32.totalorder %s22, 1
      %p80 = por %p78, %p79
      %p81 = scmp.ne.s32.totalorder %s70, %s71
      %p82 = scmp.eq.s32.totalorder %s22, 0
      %p83 = por %p81, %p82
      %p84 = scmp.ne.s32.totalorder %s70, %s71
      %p85 = scmp.eq.s32.totalorder %s23, 1
      %p86 = por %p84, %p85
      %p88 = scmp.ne.s32.totalorder %s71, %s87
      %p89 = scmp.eq.s32.totalorder %s23, 0
      %p90 = por %p88, %p89
      %s91 = ssub.s32 %s24, %s36
      %s92 = ssub.s32 %s25, %s32
      %s93 = sor.u32 %s91, %s92
      %p94 = scmp.eq.s32.totalorder %s93, 0
      %s96 = sadd.s32 %s95, 1
      %s97 = scalar_select %p94, %s95, %s96
      %p100 = pneg %p94
      %p101 = scmp.eq.s32.totalorder %s17, 1
      %p102 = por %p100, %p101
      %p103 = scmp.ne.s32.totalorder %s95, %s98
      %p104 = scmp.eq.s32.totalorder %s17, 0
      %p105 = por %p103, %p104
      %p106 = scmp.ne.s32.totalorder %s95, %s98
      %p107 = scmp.eq.s32.totalorder %s22, 1
      %p108 = por %p106, %p107
      %p109 = scmp.ne.s32.totalorder %s98, %s99
      %p110 = scmp.eq.s32.totalorder %s22, 0
      %p111 = por %p109, %p110
      %p112 = scmp.ne.s32.totalorder %s98, %s99
      %p113 = scmp.eq.s32.totalorder %s23, 1
      %p114 = por %p112, %p113
      %p116 = scmp.ne.s32.totalorder %s99, %s115
      %p117 = scmp.eq.s32.totalorder %s23, 0
      %p118 = por %p116, %p117
      %p119 = scmp.le.s32.totalorder 1, %s17
      %p120 = scmp.lt.s32.totalorder %s17, 3
      %p121 = pnand %p119, %p120
      %p122 = pneg %p121
      // Predicated region
      $region9: #{tpu_custom_call.1} parent=5 // pred_check
        _
      $region10: #{tpu_custom_call.1} parent=5 // pred_check_branch
        %124 = sbr.rel (%p121) target = $region12
      $region11: #{tpu_custom_call.1} parent=5 // pred_region
        %s125 = ssub.s32 %s17, 1
      $region12: #{tpu_custom_call.1} parent=5 // pred_fallthru
        _
      %p126 = scmp.lt.s32.totalorder %s17, 2
      // Predicated region
      $region13: #{tpu_custom_call.1} parent=5 // pred_check
        %p127 = pneg %p126
      $region14: #{tpu_custom_call.1} parent=5 // pred_check_branch
        %129 = sbr.rel (%p127) target = $region16
      $region15: #{tpu_custom_call.1} parent=5 // pred_region
        // Predicated region
        $region17: #{tpu_custom_call.1} parent=15 // pred_check
          %p130 = pneg %p51
        $region18: #{tpu_custom_call.1} parent=15 // pred_check_branch
          %132 = sbr.rel (%p130) target = $region20
        $region19: #{tpu_custom_call.1} parent=15 // pred_region
          %s133 = sand.u32 %s41, 1
          %s134 = scalar_lea.sflag [#allocation3], %s133
          %s135 = sand.u32 %s41, 1
          %s136 = smul.addr %s135, 16
          %s137 = scalar_lea.vmem [#allocation2], %s136
          %s138 = smul.u32 2, %s25
          %140 = vsyncadd %s134, 0
          %s141 = smul.addr %s24, 2
          %s142 = sadd.s32 %s138, %s141
          %s143 = smul.addr %s142, 8
          %s144 = scalar_lea.hbm %s0, %s143
          %s146 = sshll.u32 %s144, 4
          %s147 = int_to_ptr.hbm [resolvable:$true] %s146
          %s148 = sshll.u32 %s137, 4
          %s149 = int_to_ptr.vmem [resolvable:$true] %s148
          %151 = dma.hbm_to_vmem [thread:$0]  %s147, 256, %s149, %s134
        $region20: #{tpu_custom_call.1} parent=15 // pred_fallthru
          _
        // Predicated region
        $region21: #{tpu_custom_call.1} parent=15 // pred_check
          %p152 = pneg %p77
        $region22: #{tpu_custom_call.1} parent=15 // pred_check_branch
          %154 = sbr.rel (%p152) target = $region24
        $region23: #{tpu_custom_call.1} parent=15 // pred_region
          %s155 = sand.u32 %s67, 1
          %s156 = scalar_lea.sflag [#allocation6], %s155
          %s157 = sand.u32 %s67, 1
          %s158 = smul.addr %s157, 16
          %s159 = scalar_lea.vmem [#allocation5], %s158
          %161 = vsyncadd %s156, 0
          %s162 = smul.addr %s24, 2
          %s163 = smul.addr %s162, 8
          %s164 = scalar_lea.hbm %s1, %s163
          %s166 = sshll.u32 %s164, 4
          %s167 = int_to_ptr.hbm [resolvable:$true] %s166
          %s168 = sshll.u32 %s159, 4
          %s169 = int_to_ptr.vmem [resolvable:$true] %s168
          %171 = dma.hbm_to_vmem [thread:$0]  %s167, 256, %s169, %s156
        $region24: #{tpu_custom_call.1} parent=15 // pred_fallthru
          _
      $region16: #{tpu_custom_call.1} parent=5 // pred_fallthru
        _
      %p172 = scmp.le.s32.totalorder 1, %s17
      %p173 = scmp.lt.s32.totalorder %s17, 3
      %p174 = pnand %p172, %p173
      %p175 = pneg %p174
      // Predicated region
      $region25: #{tpu_custom_call.1} parent=5 // pred_check
        _
      $region26: #{tpu_custom_call.1} parent=5 // pred_check_branch
        %177 = sbr.rel (%p174) target = $region28
      $region27: #{tpu_custom_call.1} parent=5 // pred_region
        %s178 = ssub.s32 %s17, 1
        %s179 = sand.u32 %s44, 1
        %s180 = scalar_lea.sflag [#allocation3], %s179
        %s181 = sand.u32 %s44, 1
        %s182 = smul.addr %s181, 16
        %s183 = scalar_lea.vmem [#allocation2], %s182
        // Predicated region
        $region29: #{tpu_custom_call.1} parent=27 // pred_check
          %p184 = pneg %p57
        $region30: #{tpu_custom_call.1} parent=27 // pred_check_branch
          %186 = sbr.rel (%p184) target = $region32
        $region31: #{tpu_custom_call.1} parent=27 // pred_region
          %188 = dma.done %s180, 256
        $region32: #{tpu_custom_call.1} parent=27 // pred_fallthru
          _
        %s189 = sand.u32 %s70, 1
        %s190 = scalar_lea.sflag [#allocation6], %s189
        %s191 = sand.u32 %s70, 1
        %s192 = smul.addr %s191, 16
        %s193 = scalar_lea.vmem [#allocation5], %s192
        // Predicated region
        $region33: #{tpu_custom_call.1} parent=27 // pred_check
          %p194 = pneg %p83
        $region34: #{tpu_custom_call.1} parent=27 // pred_check_branch
          %196 = sbr.rel (%p194) target = $region36
        $region35: #{tpu_custom_call.1} parent=27 // pred_region
          %198 = dma.done %s190, 256
        $region36: #{tpu_custom_call.1} parent=27 // pred_fallthru
          _
        %s199 = sand.u32 %s44, 1
        %s200 = scalar_lea.sflag [#allocation3], %s199
        %s201 = sand.u32 %s44, 1
        %s202 = smul.addr %s201, 16
        %s203 = scalar_lea.vmem [#allocation2], %s202
        %p204 = pneg %p57
        %p205 = pneg %p54
        %s206 = sand.u32 %s70, 1
        %s207 = scalar_lea.sflag [#allocation6], %s206
        %s208 = sand.u32 %s70, 1
        %s209 = smul.addr %s208, 16
        %s210 = scalar_lea.vmem [#allocation5], %s209
        %p211 = pneg %p83
        %p212 = pneg %p80
        %p213 = pneg %p111
        %p214 = pneg %p108
        %s215 = sand.u32 %s98, 1
        %s216 = scalar_lea.sflag [#allocation4], %s215
        %s217 = sand.u32 %s98, 1
        %s218 = smul.addr %s217, 512
        %s219 = scalar_lea.vmem [#allocation7], %s218
        %s220 = smul.u32 2, %s27
        %s221 = smul.u32 32, %s27
        %v222 = vld [vmem:[%s183] sm:$0xff]
        %v223 = vld [vmem:[%s183 + $0x8] sm:$0xff]
        %v224 = vld [vmem:[%s193] sm:$0xff]
        %v225 = vld [vmem:[%s193 + $0x8] sm:$0xff]
        %226 = vxpose.xlu0.b32.start [1/16] %v222, 128
        %227 = vxpose.xlu0.b32.cont [2/16] 0.0, 128
        %228 = vxpose.xlu0.b32.cont [3/16] 0.0, 128
        %229 = vxpose.xlu0.b32.cont [4/16] 0.0, 128
        %230 = vxpose.xlu0.b32.cont [5/16] 0.0, 128
        %231 = vxpose.xlu0.b32.cont [6/16] 0.0, 128
        %232 = vxpose.xlu0.b32.cont [7/16] 0.0, 128
        %233 = vxpose.xlu0.b32.cont [8/16] 0.0, 128
        %234 = vxpose.xlu0.b32.cont [9/16] 0.0, 128
        %235 = vxpose.xlu0.b32.cont [10/16] 0.0, 128
        %236 = vxpose.xlu0.b32.cont [11/16] 0.0, 128
        %237 = vxpose.xlu0.b32.cont [12/16] 0.0, 128
        %238 = vxpose.xlu0.b32.cont [13/16] 0.0, 128
        %239 = vxpose.xlu0.b32.cont [14/16] 0.0, 128
        %240 = vxpose.xlu0.b32.cont [15/16] 0.0, 128
        %241 = vxpose.xlu0.b32.end [16/16] 0.0, 128
        %v242 = vpop.trf.xlu0
        %v243 = vpop.trf.xlu0
        %v244 = vpop.trf.xlu0
        %v245 = vpop.trf.xlu0
        %v246 = vpop.trf.xlu0
        %v247 = vpop.trf.xlu0
        %v248 = vpop.trf.xlu0
        %v249 = vpop.trf.xlu0
        %v250 = vpop.trf.xlu0
        %v251 = vpop.trf.xlu0
        %v252 = vpop.trf.xlu0
        %v253 = vpop.trf.xlu0
        %v254 = vpop.trf.xlu0
        %v255 = vpop.trf.xlu0
        %v256 = vpop.trf.xlu0
        %v257 = vpop.trf.xlu0
        %258 = vxpose.xlu0.b32.start [1/16] %v223, 128
        %259 = vxpose.xlu0.b32.cont [2/16] 0.0, 128
        %260 = vxpose.xlu0.b32.cont [3/16] 0.0, 128
        %261 = vxpose.xlu0.b32.cont [4/16] 0.0, 128
        %262 = vxpose.xlu0.b32.cont [5/16] 0.0, 128
        %263 = vxpose.xlu0.b32.cont [6/16] 0.0, 128
        %264 = vxpose.xlu0.b32.cont [7/16] 0.0, 128
        %265 = vxpose.xlu0.b32.cont [8/16] 0.0, 128
        %266 = vxpose.xlu0.b32.cont [9/16] 0.0, 128
        %267 = vxpose.xlu0.b32.cont [10/16] 0.0, 128
        %268 = vxpose.xlu0.b32.cont [11/16] 0.0, 128
        %269 = vxpose.xlu0.b32.cont [12/16] 0.0, 128
        %270 = vxpose.xlu0.b32.cont [13/16] 0.0, 128
        %271 = vxpose.xlu0.b32.cont [14/16] 0.0, 128
        %272 = vxpose.xlu0.b32.cont [15/16] 0.0, 128
        %273 = vxpose.xlu0.b32.end [16/16] 0.0, 128
        %v274 = vpop.trf.xlu0
        %v275 = vpop.trf.xlu0
        %v276 = vpop.trf.xlu0
        %v277 = vpop.trf.xlu0
        %v278 = vpop.trf.xlu0
        %v279 = vpop.trf.xlu0
        %v280 = vpop.trf.xlu0
        %v281 = vpop.trf.xlu0
        %v282 = vpop.trf.xlu0
        %v283 = vpop.trf.xlu0
        %v284 = vpop.trf.xlu0
        %v285 = vpop.trf.xlu0
        %v286 = vpop.trf.xlu0
        %v287 = vpop.trf.xlu0
        %v288 = vpop.trf.xlu0
        %v289 = vpop.trf.xlu0
        %vm290 = vcmask 64512
        %v292 = vsel %vm290, %v242, 0
        %v295 = vsel %vm290, %v243, 0
        %v298 = vsel %vm290, %v244, 0
        %v301 = vsel %vm290, %v245, 0
        %v304 = vsel %vm290, %v246, 0
        %v307 = vsel %vm290, %v247, 0
        %v310 = vsel %vm290, %v248, 0
        %v313 = vsel %vm290, %v249, 0
        %v316 = vsel %vm290, %v250, 0
        %v319 = vsel %vm290, %v251, 0
        %v322 = vsel %vm290, %v252, 0
        %v325 = vsel %vm290, %v253, 0
        %v328 = vsel %vm290, %v254, 0
        %v331 = vsel %vm290, %v255, 0
        %v334 = vsel %vm290, %v256, 0
        %v337 = vsel %vm290, %v257, 0
        %v340 = vsel %vm290, %v274, 0
        %v343 = vsel %vm290, %v275, 0
        %v346 = vsel %vm290, %v276, 0
        %v349 = vsel %vm290, %v277, 0
        %v352 = vsel %vm290, %v278, 0
        %v355 = vsel %vm290, %v279, 0
        %v358 = vsel %vm290, %v280, 0
        %v361 = vsel %vm290, %v281, 0
        %v364 = vsel %vm290, %v282, 0
        %v367 = vsel %vm290, %v283, 0
        %v370 = vsel %vm290, %v284, 0
        %v373 = vsel %vm290, %v285, 0
        %v376 = vsel %vm290, %v286, 0
        %v379 = vsel %vm290, %v287, 0
        %v382 = vsel %vm290, %v288, 0
        %v385 = vsel %vm290, %v289, 0
        %387 = vmatpush.msra.mxu0 0.0
        %388 = vmatpush.msra.mxu0 0.0
        %389 = vmatpush.msra.mxu0 0.0
        %390 = vmatpush.msra.mxu0 0.0
        %391 = vmatpush.msra.mxu0 0.0
        %392 = vmatpush.msra.mxu0 0.0
        %393 = vmatpush.msra.mxu0 0.0
        %394 = vmatpush.msra.mxu0 0.0
        %395 = vmatpush.msra.mxu0 0.0
        %396 = vmatpush.msra.mxu0 0.0
        %397 = vmatpush.msra.mxu0 0.0
        %398 = vmatpush.msra.mxu0 0.0
        %399 = vmatpush.msra.mxu0 0.0
        %400 = vmatpush.msra.mxu0 0.0
        %401 = vmatpush.msra.mxu0 0.0
        %402 = vmatpush.msra.mxu0 %v224
        %403 = vmatmul.f32.gmra.mxu0 %v292
        %v404 = vpop.f32.mrf.mxu0
        %v405 = vadd.f32 0.0, %v404
        %406 = vmatmul.f32.gmra.mxu0 %v295
        %v407 = vpop.f32.mrf.mxu0
        %v408 = vadd.f32 0.0, %v407
        %409 = vmatmul.f32.gmra.mxu0 %v298
        %v410 = vpop.f32.mrf.mxu0
        %v411 = vadd.f32 0.0, %v410
        %412 = vmatmul.f32.gmra.mxu0 %v301
        %v413 = vpop.f32.mrf.mxu0
        %v414 = vadd.f32 0.0, %v413
        %415 = vmatmul.f32.gmra.mxu0 %v304
        %v416 = vpop.f32.mrf.mxu0
        %v417 = vadd.f32 0.0, %v416
        %418 = vmatmul.f32.gmra.mxu0 %v307
        %v419 = vpop.f32.mrf.mxu0
        %v420 = vadd.f32 0.0, %v419
        %421 = vmatmul.f32.gmra.mxu0 %v310
        %v422 = vpop.f32.mrf.mxu0
        %v423 = vadd.f32 0.0, %v422
        %424 = vmatmul.f32.gmra.mxu0 %v313
        %v425 = vpop.f32.mrf.mxu0
        %v426 = vadd.f32 0.0, %v425
        %427 = vmatmul.f32.gmra.mxu0 %v316
        %v428 = vpop.f32.mrf.mxu0
        %v429 = vadd.f32 0.0, %v428
        %430 = vmatmul.f32.gmra.mxu0 %v319
        %v431 = vpop.f32.mrf.mxu0
        %v432 = vadd.f32 0.0, %v431
        %433 = vmatmul.f32.gmra.mxu0 %v322
        %v434 = vpop.f32.mrf.mxu0
        %v435 = vadd.f32 0.0, %v434
        %436 = vmatmul.f32.gmra.mxu0 %v325
        %v437 = vpop.f32.mrf.mxu0
        %v438 = vadd.f32 0.0, %v437
        %439 = vmatmul.f32.gmra.mxu0 %v328
        %v440 = vpop.f32.mrf.mxu0
        %v441 = vadd.f32 0.0, %v440
        %442 = vmatmul.f32.gmra.mxu0 %v331
        %v443 = vpop.f32.mrf.mxu0
        %v444 = vadd.f32 0.0, %v443
        %445 = vmatmul.f32.gmra.mxu0 %v334
        %v446 = vpop.f32.mrf.mxu0
        %v447 = vadd.f32 0.0, %v446
        %448 = vmatmul.f32.gmra.mxu0 %v337
        %v449 = vpop.f32.mrf.mxu0
        %v450 = vadd.f32 0.0, %v449
        %451 = vmatmul.f32.gmra.mxu0 %v340
        %v452 = vpop.f32.mrf.mxu0
        %v453 = vadd.f32 0.0, %v452
        %454 = vmatmul.f32.gmra.mxu0 %v343
        %v455 = vpop.f32.mrf.mxu0
        %v456 = vadd.f32 0.0, %v455
        %457 = vmatmul.f32.gmra.mxu0 %v346
        %v458 = vpop.f32.mrf.mxu0
        %v459 = vadd.f32 0.0, %v458
        %460 = vmatmul.f32.gmra.mxu0 %v349
        %v461 = vpop.f32.mrf.mxu0
        %v462 = vadd.f32 0.0, %v461
        %463 = vmatmul.f32.gmra.mxu0 %v352
        %v464 = vpop.f32.mrf.mxu0
        %v465 = vadd.f32 0.0, %v464
        %466 = vmatmul.f32.gmra.mxu0 %v355
        %v467 = vpop.f32.mrf.mxu0
        %v468 = vadd.f32 0.0, %v467
        %469 = vmatmul.f32.gmra.mxu0 %v358
        %v470 = vpop.f32.mrf.mxu0
        %v471 = vadd.f32 0.0, %v470
        %472 = vmatmul.f32.gmra.mxu0 %v361
        %v473 = vpop.f32.mrf.mxu0
        %v474 = vadd.f32 0.0, %v473
        %475 = vmatmul.f32.gmra.mxu0 %v364
        %v476 = vpop.f32.mrf.mxu0
        %v477 = vadd.f32 0.0, %v476
        %478 = vmatmul.f32.gmra.mxu0 %v367
        %v479 = vpop.f32.mrf.mxu0
        %v480 = vadd.f32 0.0, %v479
        %481 = vmatmul.f32.gmra.mxu0 %v370
        %v482 = vpop.f32.mrf.mxu0
        %v483 = vadd.f32 0.0, %v482
        %484 = vmatmul.f32.gmra.mxu0 %v373
        %v485 = vpop.f32.mrf.mxu0
        %v486 = vadd.f32 0.0, %v485
        %487 = vmatmul.f32.gmra.mxu0 %v376
        %v488 = vpop.f32.mrf.mxu0
        %v489 = vadd.f32 0.0, %v488
        %490 = vmatmul.f32.gmra.mxu0 %v379
        %v491 = vpop.f32.mrf.mxu0
        %v492 = vadd.f32 0.0, %v491
        %493 = vmatmul.f32.gmra.mxu0 %v382
        %v494 = vpop.f32.mrf.mxu0
        %v495 = vadd.f32 0.0, %v494
        %496 = vmatmul.f32.gmra.mxu0 %v385
        %v497 = vpop.f32.mrf.mxu0
        %v498 = vadd.f32 0.0, %v497
        %499 = vdwg.mxu0
        %500 = vmatpush.msra.mxu0 0.0
        %501 = vmatpush.msra.mxu0 0.0
        %502 = vmatpush.msra.mxu0 0.0
        %503 = vmatpush.msra.mxu0 0.0
        %504 = vmatpush.msra.mxu0 0.0
        %505 = vmatpush.msra.mxu0 0.0
        %506 = vmatpush.msra.mxu0 0.0
        %507 = vmatpush.msra.mxu0 0.0
        %508 = vmatpush.msra.mxu0 0.0
        %509 = vmatpush.msra.mxu0 0.0
        %510 = vmatpush.msra.mxu0 0.0
        %511 = vmatpush.msra.mxu0 0.0
        %512 = vmatpush.msra.mxu0 0.0
        %513 = vmatpush.msra.mxu0 0.0
        %514 = vmatpush.msra.mxu0 0.0
        %515 = vmatpush.msra.mxu0 %v225
        %516 = vmatmul.f32.gmra.mxu0 %v292
        %v517 = vpop.f32.mrf.mxu0
        %v518 = vadd.f32 0.0, %v517
        %519 = vmatmul.f32.gmra.mxu0 %v295
        %v520 = vpop.f32.mrf.mxu0
        %v521 = vadd.f32 0.0, %v520
        %522 = vmatmul.f32.gmra.mxu0 %v298
        %v523 = vpop.f32.mrf.mxu0
        %v524 = vadd.f32 0.0, %v523
        %525 = vmatmul.f32.gmra.mxu0 %v301
        %v526 = vpop.f32.mrf.mxu0
        %v527 = vadd.f32 0.0, %v526
        %528 = vmatmul.f32.gmra.mxu0 %v304
        %v529 = vpop.f32.mrf.mxu0
        %v530 = vadd.f32 0.0, %v529
        %531 = vmatmul.f32.gmra.mxu0 %v307
        %v532 = vpop.f32.mrf.mxu0
        %v533 = vadd.f32 0.0, %v532
        %534 = vmatmul.f32.gmra.mxu0 %v310
        %v535 = vpop.f32.mrf.mxu0
        %v536 = vadd.f32 0.0, %v535
        %537 = vmatmul.f32.gmra.mxu0 %v313
        %v538 = vpop.f32.mrf.mxu0
        %v539 = vadd.f32 0.0, %v538
        %540 = vmatmul.f32.gmra.mxu0 %v316
        %v541 = vpop.f32.mrf.mxu0
        %v542 = vadd.f32 0.0, %v541
        %543 = vmatmul.f32.gmra.mxu0 %v319
        %v544 = vpop.f32.mrf.mxu0
        %v545 = vadd.f32 0.0, %v544
        %546 = vmatmul.f32.gmra.mxu0 %v322
        %v547 = vpop.f32.mrf.mxu0
        %v548 = vadd.f32 0.0, %v547
        %549 = vmatmul.f32.gmra.mxu0 %v325
        %v550 = vpop.f32.mrf.mxu0
        %v551 = vadd.f32 0.0, %v550
        %552 = vmatmul.f32.gmra.mxu0 %v328
        %v553 = vpop.f32.mrf.mxu0
        %v554 = vadd.f32 0.0, %v553
        %555 = vmatmul.f32.gmra.mxu0 %v331
        %v556 = vpop.f32.mrf.mxu0
        %v557 = vadd.f32 0.0, %v556
        %558 = vmatmul.f32.gmra.mxu0 %v334
        %v559 = vpop.f32.mrf.mxu0
        %v560 = vadd.f32 0.0, %v559
        %561 = vmatmul.f32.gmra.mxu0 %v337
        %v562 = vpop.f32.mrf.mxu0
        %v563 = vadd.f32 0.0, %v562
        %564 = vmatmul.f32.gmra.mxu0 %v340
        %v565 = vpop.f32.mrf.mxu0
        %v566 = vadd.f32 0.0, %v565
        %567 = vmatmul.f32.gmra.mxu0 %v343
        %v568 = vpop.f32.mrf.mxu0
        %v569 = vadd.f32 0.0, %v568
        %570 = vmatmul.f32.gmra.mxu0 %v346
        %v571 = vpop.f32.mrf.mxu0
        %v572 = vadd.f32 0.0, %v571
        %573 = vmatmul.f32.gmra.mxu0 %v349
        %v574 = vpop.f32.mrf.mxu0
        %v575 = vadd.f32 0.0, %v574
        %576 = vmatmul.f32.gmra.mxu0 %v352
        %v577 = vpop.f32.mrf.mxu0
        %v578 = vadd.f32 0.0, %v577
        %579 = vmatmul.f32.gmra.mxu0 %v355
        %v580 = vpop.f32.mrf.mxu0
        %v581 = vadd.f32 0.0, %v580
        %582 = vmatmul.f32.gmra.mxu0 %v358
        %v583 = vpop.f32.mrf.mxu0
        %v584 = vadd.f32 0.0, %v583
        %585 = vmatmul.f32.gmra.mxu0 %v361
        %v586 = vpop.f32.mrf.mxu0
        %v587 = vadd.f32 0.0, %v586
        %588 = vmatmul.f32.gmra.mxu0 %v364
        %v589 = vpop.f32.mrf.mxu0
        %v590 = vadd.f32 0.0, %v589
        %591 = vmatmul.f32.gmra.mxu0 %v367
        %v592 = vpop.f32.mrf.mxu0
        %v593 = vadd.f32 0.0, %v592
        %594 = vmatmul.f32.gmra.mxu0 %v370
        %v595 = vpop.f32.mrf.mxu0
        %v596 = vadd.f32 0.0, %v595
        %597 = vmatmul.f32.gmra.mxu0 %v373
        %v598 = vpop.f32.mrf.mxu0
        %v599 = vadd.f32 0.0, %v598
        %600 = vmatmul.f32.gmra.mxu0 %v376
        %v601 = vpop.f32.mrf.mxu0
        %v602 = vadd.f32 0.0, %v601
        %603 = vmatmul.f32.gmra.mxu0 %v379
        %v604 = vpop.f32.mrf.mxu0
        %v605 = vadd.f32 0.0, %v604
        %606 = vmatmul.f32.gmra.mxu0 %v382
        %v607 = vpop.f32.mrf.mxu0
        %v608 = vadd.f32 0.0, %v607
        %609 = vmatmul.f32.gmra.mxu0 %v385
        %v610 = vpop.f32.mrf.mxu0
        %v611 = vadd.f32 0.0, %v610
        %612 = vdwg.mxu0
        %v613 = vmax.f32 %v405, %v518
        %614 = vmax.xlane.f32.xlu0 %v613
        %v615 = vpop.xlane.xlu0 %614
        %v616 = vmax.f32 %v408, %v521
        %617 = vmax.xlane.f32.xlu0 %v616
        %v618 = vpop.xlane.xlu0 %617
        %v619 = vmax.f32 %v411, %v524
        %620 = vmax.xlane.f32.xlu0 %v619
        %v621 = vpop.xlane.xlu0 %620
        %v622 = vmax.f32 %v414, %v527
        %623 = vmax.xlane.f32.xlu0 %v622
        %v624 = vpop.xlane.xlu0 %623
        %v625 = vmax.f32 %v417, %v530
        %626 = vmax.xlane.f32.xlu0 %v625
        %v627 = vpop.xlane.xlu0 %626
        %v628 = vmax.f32 %v420, %v533
        %629 = vmax.xlane.f32.xlu0 %v628
        %v630 = vpop.xlane.xlu0 %629
        %v631 = vmax.f32 %v423, %v536
        %632 = vmax.xlane.f32.xlu0 %v631
        %v633 = vpop.xlane.xlu0 %632
        %v634 = vmax.f32 %v426, %v539
        %635 = vmax.xlane.f32.xlu0 %v634
        %v636 = vpop.xlane.xlu0 %635
        %v637 = vmax.f32 %v429, %v542
        %638 = vmax.xlane.f32.xlu0 %v637
        %v639 = vpop.xlane.xlu0 %638
        %v640 = vmax.f32 %v432, %v545
        %641 = vmax.xlane.f32.xlu0 %v640
        %v642 = vpop.xlane.xlu0 %641
        %v643 = vmax.f32 %v435, %v548
        %644 = vmax.xlane.f32.xlu0 %v643
        %v645 = vpop.xlane.xlu0 %644
        %v646 = vmax.f32 %v438, %v551
        %647 = vmax.xlane.f32.xlu0 %v646
        %v648 = vpop.xlane.xlu0 %647
        %v649 = vmax.f32 %v441, %v554
        %650 = vmax.xlane.f32.xlu0 %v649
        %v651 = vpop.xlane.xlu0 %650
        %v652 = vmax.f32 %v444, %v557
        %653 = vmax.xlane.f32.xlu0 %v652
        %v654 = vpop.xlane.xlu0 %653
        %v655 = vmax.f32 %v447, %v560
        %656 = vmax.xlane.f32.xlu0 %v655
        %v657 = vpop.xlane.xlu0 %656
        %v658 = vmax.f32 %v450, %v563
        %659 = vmax.xlane.f32.xlu0 %v658
        %v660 = vpop.xlane.xlu0 %659
        %v661 = vmax.f32 %v453, %v566
        %662 = vmax.xlane.f32.xlu0 %v661
        %v663 = vpop.xlane.xlu0 %662
        %v664 = vmax.f32 %v456, %v569
        %665 = vmax.xlane.f32.xlu0 %v664
        %v666 = vpop.xlane.xlu0 %665
        %v667 = vmax.f32 %v459, %v572
        %668 = vmax.xlane.f32.xlu0 %v667
        %v669 = vpop.xlane.xlu0 %668
        %v670 = vmax.f32 %v462, %v575
        %671 = vmax.xlane.f32.xlu0 %v670
        %v672 = vpop.xlane.xlu0 %671
        %v673 = vmax.f32 %v465, %v578
        %674 = vmax.xlane.f32.xlu0 %v673
        %v675 = vpop.xlane.xlu0 %674
        %v676 = vmax.f32 %v468, %v581
        %677 = vmax.xlane.f32.xlu0 %v676
        %v678 = vpop.xlane.xlu0 %677
        %v679 = vmax.f32 %v471, %v584
        %680 = vmax.xlane.f32.xlu0 %v679
        %v681 = vpop.xlane.xlu0 %680
        %v682 = vmax.f32 %v474, %v587
        %683 = vmax.xlane.f32.xlu0 %v682
        %v684 = vpop.xlane.xlu0 %683
        %v685 = vmax.f32 %v477, %v590
        %686 = vmax.xlane.f32.xlu0 %v685
        %v687 = vpop.xlane.xlu0 %686
        %v688 = vmax.f32 %v480, %v593
        %689 = vmax.xlane.f32.xlu0 %v688
        %v690 = vpop.xlane.xlu0 %689
        %v691 = vmax.f32 %v483, %v596
        %692 = vmax.xlane.f32.xlu0 %v691
        %v693 = vpop.xlane.xlu0 %692
        %v694 = vmax.f32 %v486, %v599
        %695 = vmax.xlane.f32.xlu0 %v694
        %v696 = vpop.xlane.xlu0 %695
        %v697 = vmax.f32 %v489, %v602
        %698 = vmax.xlane.f32.xlu0 %v697
        %v699 = vpop.xlane.xlu0 %698
        %v700 = vmax.f32 %v492, %v605
        %701 = vmax.xlane.f32.xlu0 %v700
        %v702 = vpop.xlane.xlu0 %701
        %v703 = vmax.f32 %v495, %v608
        %704 = vmax.xlane.f32.xlu0 %v703
        %v705 = vpop.xlane.xlu0 %704
        %v706 = vmax.f32 %v498, %v611
        %707 = vmax.xlane.f32.xlu0 %v706
        %v708 = vpop.xlane.xlu0 %707
        %v709 = vsub.f32 %v405, %v615
        %v710 = vsub.f32 %v518, %v615
        %v711 = vsub.f32 %v408, %v618
        %v712 = vsub.f32 %v521, %v618
        %v713 = vsub.f32 %v411, %v621
        %v714 = vsub.f32 %v524, %v621
        %v715 = vsub.f32 %v414, %v624
        %v716 = vsub.f32 %v527, %v624
        %v717 = vsub.f32 %v417, %v627
        %v718 = vsub.f32 %v530, %v627
        %v719 = vsub.f32 %v420, %v630
        %v720 = vsub.f32 %v533, %v630
        %v721 = vsub.f32 %v423, %v633
        %v722 = vsub.f32 %v536, %v633
        %v723 = vsub.f32 %v426, %v636
        %v724 = vsub.f32 %v539, %v636
        %v725 = vsub.f32 %v429, %v639
        %v726 = vsub.f32 %v542, %v639
        %v727 = vsub.f32 %v432, %v642
        %v728 = vsub.f32 %v545, %v642
        %v729 = vsub.f32 %v435, %v645
        %v730 = vsub.f32 %v548, %v645
        %v731 = vsub.f32 %v438, %v648
        %v732 = vsub.f32 %v551, %v648
        %v733 = vsub.f32 %v441, %v651
        %v734 = vsub.f32 %v554, %v651
        %v735 = vsub.f32 %v444, %v654
        %v736 = vsub.f32 %v557, %v654
        %v737 = vsub.f32 %v447, %v657
        %v738 = vsub.f32 %v560, %v657
        %v739 = vsub.f32 %v450, %v660
        %v740 = vsub.f32 %v563, %v660
        %v741 = vsub.f32 %v453, %v663
        %v742 = vsub.f32 %v566, %v663
        %v743 = vsub.f32 %v456, %v666
        %v744 = vsub.f32 %v569, %v666
        %v745 = vsub.f32 %v459, %v669
        %v746 = vsub.f32 %v572, %v669
        %v747 = vsub.f32 %v462, %v672
        %v748 = vsub.f32 %v575, %v672
        %v749 = vsub.f32 %v465, %v675
        %v750 = vsub.f32 %v578, %v675
        %v751 = vsub.f32 %v468, %v678
        %v752 = vsub.f32 %v581, %v678
        %v753 = vsub.f32 %v471, %v681
        %v754 = vsub.f32 %v584, %v681
        %v755 = vsub.f32 %v474, %v684
        %v756 = vsub.f32 %v587, %v684
        %v757 = vsub.f32 %v477, %v687
        %v758 = vsub.f32 %v590, %v687
        %v759 = vsub.f32 %v480, %v690
        %v760 = vsub.f32 %v593, %v690
        %v761 = vsub.f32 %v483, %v693
        %v762 = vsub.f32 %v596, %v693
        %v763 = vsub.f32 %v486, %v696
        %v764 = vsub.f32 %v599, %v696
        %v765 = vsub.f32 %v489, %v699
        %v766 = vsub.f32 %v602, %v699
        %v767 = vsub.f32 %v492, %v702
        %v768 = vsub.f32 %v605, %v702
        %v769 = vsub.f32 %v495, %v705
        %v770 = vsub.f32 %v608, %v705
        %v771 = vsub.f32 %v498, %v708
        %v772 = vsub.f32 %v611, %v708
        %v773 = vmul.f32 %v709, 1.442695
        %v774 = vpow.pop %v773
        %v775 = vmul.f32 %v710, 1.442695
        %v776 = vpow.pop %v775
        %v777 = vmul.f32 %v711, 1.442695
        %v778 = vpow.pop %v777
        %v779 = vmul.f32 %v712, 1.442695
        %v780 = vpow.pop %v779
        %v781 = vmul.f32 %v713, 1.442695
        %v782 = vpow.pop %v781
        %v783 = vmul.f32 %v714, 1.442695
        %v784 = vpow.pop %v783
        %v785 = vmul.f32 %v715, 1.442695
        %v786 = vpow.pop %v785
        %v787 = vmul.f32 %v716, 1.442695
        %v788 = vpow.pop %v787
        %v789 = vmul.f32 %v717, 1.442695
        %v790 = vpow.pop %v789
        %v791 = vmul.f32 %v718, 1.442695
        %v792 = vpow.pop %v791
        %v793 = vmul.f32 %v719, 1.442695
        %v794 = vpow.pop %v793
        %v795 = vmul.f32 %v720, 1.442695
        %v796 = vpow.pop %v795
        %v797 = vmul.f32 %v721, 1.442695
        %v798 = vpow.pop %v797
        %v799 = vmul.f32 %v722, 1.442695
        %v800 = vpow.pop %v799
        %v801 = vmul.f32 %v723, 1.442695
        %v802 = vpow.pop %v801
        %v803 = vmul.f32 %v724, 1.442695
        %v804 = vpow.pop %v803
        %v805 = vmul.f32 %v725, 1.442695
        %v806 = vpow.pop %v805
        %v807 = vmul.f32 %v726, 1.442695
        %v808 = vpow.pop %v807
        %v809 = vmul.f32 %v727, 1.442695
        %v810 = vpow.pop %v809
        %v811 = vmul.f32 %v728, 1.442695
        %v812 = vpow.pop %v811
        %v813 = vmul.f32 %v729, 1.442695
        %v814 = vpow.pop %v813
        %v815 = vmul.f32 %v730, 1.442695
        %v816 = vpow.pop %v815
        %v817 = vmul.f32 %v731, 1.442695
        %v818 = vpow.pop %v817
        %v819 = vmul.f32 %v732, 1.442695
        %v820 = vpow.pop %v819
        %v821 = vmul.f32 %v733, 1.442695
        %v822 = vpow.pop %v821
        %v823 = vmul.f32 %v734, 1.442695
        %v824 = vpow.pop %v823
        %v825 = vmul.f32 %v735, 1.442695
        %v826 = vpow.pop %v825
        %v827 = vmul.f32 %v736, 1.442695
        %v828 = vpow.pop %v827
        %v829 = vmul.f32 %v737, 1.442695
        %v830 = vpow.pop %v829
        %v831 = vmul.f32 %v738, 1.442695
        %v832 = vpow.pop %v831
        %v833 = vmul.f32 %v739, 1.442695
        %v834 = vpow.pop %v833
        %v835 = vmul.f32 %v740, 1.442695
        %v836 = vpow.pop %v835
        %v837 = vmul.f32 %v741, 1.442695
        %v838 = vpow.pop %v837
        %v839 = vmul.f32 %v742, 1.442695
        %v840 = vpow.pop %v839
        %v841 = vmul.f32 %v743, 1.442695
        %v842 = vpow.pop %v841
        %v843 = vmul.f32 %v744, 1.442695
        %v844 = vpow.pop %v843
        %v845 = vmul.f32 %v745, 1.442695
        %v846 = vpow.pop %v845
        %v847 = vmul.f32 %v746, 1.442695
        %v848 = vpow.pop %v847
        %v849 = vmul.f32 %v747, 1.442695
        %v850 = vpow.pop %v849
        %v851 = vmul.f32 %v748, 1.442695
        %v852 = vpow.pop %v851
        %v853 = vmul.f32 %v749, 1.442695
        %v854 = vpow.pop %v853
        %v855 = vmul.f32 %v750, 1.442695
        %v856 = vpow.pop %v855
        %v857 = vmul.f32 %v751, 1.442695
        %v858 = vpow.pop %v857
        %v859 = vmul.f32 %v752, 1.442695
        %v860 = vpow.pop %v859
        %v861 = vmul.f32 %v753, 1.442695
        %v862 = vpow.pop %v861
        %v863 = vmul.f32 %v754, 1.442695
        %v864 = vpow.pop %v863
        %v865 = vmul.f32 %v755, 1.442695
        %v866 = vpow.pop %v865
        %v867 = vmul.f32 %v756, 1.442695
        %v868 = vpow.pop %v867
        %v869 = vmul.f32 %v757, 1.442695
        %v870 = vpow.pop %v869
        %v871 = vmul.f32 %v758, 1.442695
        %v872 = vpow.pop %v871
        %v873 = vmul.f32 %v759, 1.442695
        %v874 = vpow.pop %v873
        %v875 = vmul.f32 %v760, 1.442695
        %v876 = vpow.pop %v875
        %v877 = vmul.f32 %v761, 1.442695
        %v878 = vpow.pop %v877
        %v879 = vmul.f32 %v762, 1.442695
        %v880 = vpow.pop %v879
        %v881 = vmul.f32 %v763, 1.442695
        %v882 = vpow.pop %v881
        %v883 = vmul.f32 %v764, 1.442695
        %v884 = vpow.pop %v883
        %v885 = vmul.f32 %v765, 1.442695
        %v886 = vpow.pop %v885
        %v887 = vmul.f32 %v766, 1.442695
        %v888 = vpow.pop %v887
        %v889 = vmul.f32 %v767, 1.442695
        %v890 = vpow.pop %v889
        %v891 = vmul.f32 %v768, 1.442695
        %v892 = vpow.pop %v891
        %v893 = vmul.f32 %v769, 1.442695
        %v894 = vpow.pop %v893
        %v895 = vmul.f32 %v770, 1.442695
        %v896 = vpow.pop %v895
        %v897 = vmul.f32 %v771, 1.442695
        %v898 = vpow.pop %v897
        %v899 = vmul.f32 %v772, 1.442695
        %v900 = vpow.pop %v899
        %v901 = vadd.f32 %v774, %v776
        %902 = vadd.xlane.f32.xlu0 %v901
        %v903 = vpop.xlane.xlu0 %902
        %v904 = vadd.f32 %v778, %v780
        %905 = vadd.xlane.f32.xlu0 %v904
        %v906 = vpop.xlane.xlu0 %905
        %v907 = vadd.f32 %v782, %v784
        %908 = vadd.xlane.f32.xlu0 %v907
        %v909 = vpop.xlane.xlu0 %908
        %v910 = vadd.f32 %v786, %v788
        %911 = vadd.xlane.f32.xlu0 %v910
        %v912 = vpop.xlane.xlu0 %911
        %v913 = vadd.f32 %v790, %v792
        %914 = vadd.xlane.f32.xlu0 %v913
        %v915 = vpop.xlane.xlu0 %914
        %v916 = vadd.f32 %v794, %v796
        %917 = vadd.xlane.f32.xlu0 %v916
        %v918 = vpop.xlane.xlu0 %917
        %v919 = vadd.f32 %v798, %v800
        %920 = vadd.xlane.f32.xlu0 %v919
        %v921 = vpop.xlane.xlu0 %920
        %v922 = vadd.f32 %v802, %v804
        %923 = vadd.xlane.f32.xlu0 %v922
        %v924 = vpop.xlane.xlu0 %923
        %v925 = vadd.f32 %v806, %v808
        %926 = vadd.xlane.f32.xlu0 %v925
        %v927 = vpop.xlane.xlu0 %926
        %v928 = vadd.f32 %v810, %v812
        %929 = vadd.xlane.f32.xlu0 %v928
        %v930 = vpop.xlane.xlu0 %929
        %v931 = vadd.f32 %v814, %v816
        %932 = vadd.xlane.f32.xlu0 %v931
        %v933 = vpop.xlane.xlu0 %932
        %v934 = vadd.f32 %v818, %v820
        %935 = vadd.xlane.f32.xlu0 %v934
        %v936 = vpop.xlane.xlu0 %935
        %v937 = vadd.f32 %v822, %v824
        %938 = vadd.xlane.f32.xlu0 %v937
        %v939 = vpop.xlane.xlu0 %938
        %v940 = vadd.f32 %v826, %v828
        %941 = vadd.xlane.f32.xlu0 %v940
        %v942 = vpop.xlane.xlu0 %941
        %v943 = vadd.f32 %v830, %v832
        %944 = vadd.xlane.f32.xlu0 %v943
        %v945 = vpop.xlane.xlu0 %944
        %v946 = vadd.f32 %v834, %v836
        %947 = vadd.xlane.f32.xlu0 %v946
        %v948 = vpop.xlane.xlu0 %947
        %v949 = vadd.f32 %v838, %v840
        %950 = vadd.xlane.f32.xlu0 %v949
        %v951 = vpop.xlane.xlu0 %950
        %v952 = vadd.f32 %v842, %v844
        %953 = vadd.xlane.f32.xlu0 %v952
        %v954 = vpop.xlane.xlu0 %953
        %v955 = vadd.f32 %v846, %v848
        %956 = vadd.xlane.f32.xlu0 %v955
        %v957 = vpop.xlane.xlu0 %956
        %v958 = vadd.f32 %v850, %v852
        %959 = vadd.xlane.f32.xlu0 %v958
        %v960 = vpop.xlane.xlu0 %959
        %v961 = vadd.f32 %v854, %v856
        %962 = vadd.xlane.f32.xlu0 %v961
        %v963 = vpop.xlane.xlu0 %962
        %v964 = vadd.f32 %v858, %v860
        %965 = vadd.xlane.f32.xlu0 %v964
        %v966 = vpop.xlane.xlu0 %965
        %v967 = vadd.f32 %v862, %v864
        %968 = vadd.xlane.f32.xlu0 %v967
        %v969 = vpop.xlane.xlu0 %968
        %v970 = vadd.f32 %v866, %v868
        %971 = vadd.xlane.f32.xlu0 %v970
        %v972 = vpop.xlane.xlu0 %971
        %v973 = vadd.f32 %v870, %v872
        %974 = vadd.xlane.f32.xlu0 %v973
        %v975 = vpop.xlane.xlu0 %974
        %v976 = vadd.f32 %v874, %v876
        %977 = vadd.xlane.f32.xlu0 %v976
        %v978 = vpop.xlane.xlu0 %977
        %v979 = vadd.f32 %v878, %v880
        %980 = vadd.xlane.f32.xlu0 %v979
        %v981 = vpop.xlane.xlu0 %980
        %v982 = vadd.f32 %v882, %v884
        %983 = vadd.xlane.f32.xlu0 %v982
        %v984 = vpop.xlane.xlu0 %983
        %v985 = vadd.f32 %v886, %v888
        %986 = vadd.xlane.f32.xlu0 %v985
        %v987 = vpop.xlane.xlu0 %986
        %v988 = vadd.f32 %v890, %v892
        %989 = vadd.xlane.f32.xlu0 %v988
        %v990 = vpop.xlane.xlu0 %989
        %v991 = vadd.f32 %v894, %v896
        %992 = vadd.xlane.f32.xlu0 %v991
        %v993 = vpop.xlane.xlu0 %992
        %v994 = vadd.f32 %v898, %v900
        %995 = vadd.xlane.f32.xlu0 %v994
        %v996 = vpop.xlane.xlu0 %995
        %v997 = vrcp.pop %v903
        %v998 = vrcp.pop %v906
        %v999 = vrcp.pop %v909
        %v1000 = vrcp.pop %v912
        %v1001 = vrcp.pop %v915
        %v1002 = vrcp.pop %v918
        %v1003 = vrcp.pop %v921
        %v1004 = vrcp.pop %v924
        %v1005 = vrcp.pop %v927
        %v1006 = vrcp.pop %v930
        %v1007 = vrcp.pop %v933
        %v1008 = vrcp.pop %v936
        %v1009 = vrcp.pop %v939
        %v1010 = vrcp.pop %v942
        %v1011 = vrcp.pop %v945
        %v1012 = vrcp.pop %v948
        %v1013 = vrcp.pop %v951
        %v1014 = vrcp.pop %v954
        %v1015 = vrcp.pop %v957
        %v1016 = vrcp.pop %v960
        %v1017 = vrcp.pop %v963
        %v1018 = vrcp.pop %v966
        %v1019 = vrcp.pop %v969
        %v1020 = vrcp.pop %v972
        %v1021 = vrcp.pop %v975
        %v1022 = vrcp.pop %v978
        %v1023 = vrcp.pop %v981
        %v1024 = vrcp.pop %v984
        %v1025 = vrcp.pop %v987
        %v1026 = vrcp.pop %v990
        %v1027 = vrcp.pop %v993
        %v1028 = vrcp.pop %v996
        %v1029 = vmul.f32 %v903, %v997
        %v1030 = vmul.f32 %v906, %v998
        %v1031 = vmul.f32 %v909, %v999
        %v1032 = vmul.f32 %v912, %v1000
        %v1033 = vmul.f32 %v915, %v1001
        %v1034 = vmul.f32 %v918, %v1002
        %v1035 = vmul.f32 %v921, %v1003
        %v1036 = vmul.f32 %v924, %v1004
        %v1037 = vmul.f32 %v927, %v1005
        %v1038 = vmul.f32 %v930, %v1006
        %v1039 = vmul.f32 %v933, %v1007
        %v1040 = vmul.f32 %v936, %v1008
        %v1041 = vmul.f32 %v939, %v1009
        %v1042 = vmul.f32 %v942, %v1010
        %v1043 = vmul.f32 %v945, %v1011
        %v1044 = vmul.f32 %v948, %v1012
        %v1045 = vmul.f32 %v951, %v1013
        %v1046 = vmul.f32 %v954, %v1014
        %v1047 = vmul.f32 %v957, %v1015
        %v1048 = vmul.f32 %v960, %v1016
        %v1049 = vmul.f32 %v963, %v1017
        %v1050 = vmul.f32 %v966, %v1018
        %v1051 = vmul.f32 %v969, %v1019
        %v1052 = vmul.f32 %v972, %v1020
        %v1053 = vmul.f32 %v975, %v1021
        %v1054 = vmul.f32 %v978, %v1022
        %v1055 = vmul.f32 %v981, %v1023
        %v1056 = vmul.f32 %v984, %v1024
        %v1057 = vmul.f32 %v987, %v1025
        %v1058 = vmul.f32 %v990, %v1026
        %v1059 = vmul.f32 %v993, %v1027
        %v1060 = vmul.f32 %v996, %v1028
        %v1061 = vsub.f32 2.0, %v1029
        %v1062 = vsub.f32 2.0, %v1030
        %v1063 = vsub.f32 2.0, %v1031
        %v1064 = vsub.f32 2.0, %v1032
        %v1065 = vsub.f32 2.0, %v1033
        %v1066 = vsub.f32 2.0, %v1034
        %v1067 = vsub.f32 2.0, %v1035
        %v1068 = vsub.f32 2.0, %v1036
        %v1069 = vsub.f32 2.0, %v1037
        %v1070 = vsub.f32 2.0, %v1038
        %v1071 = vsub.f32 2.0, %v1039
        %v1072 = vsub.f32 2.0, %v1040
        %v1073 = vsub.f32 2.0, %v1041
        %v1074 = vsub.f32 2.0, %v1042
        %v1075 = vsub.f32 2.0, %v1043
        %v1076 = vsub.f32 2.0, %v1044
        %v1077 = vsub.f32 2.0, %v1045
        %v1078 = vsub.f32 2.0, %v1046
        %v1079 = vsub.f32 2.0, %v1047
        %v1080 = vsub.f32 2.0, %v1048
        %v1081 = vsub.f32 2.0, %v1049
        %v1082 = vsub.f32 2.0, %v1050
        %v1083 = vsub.f32 2.0, %v1051
        %v1084 = vsub.f32 2.0, %v1052
        %v1085 = vsub.f32 2.0, %v1053
        %v1086 = vsub.f32 2.0, %v1054
        %v1087 = vsub.f32 2.0, %v1055
        %v1088 = vsub.f32 2.0, %v1056
        %v1089 = vsub.f32 2.0, %v1057
        %v1090 = vsub.f32 2.0, %v1058
        %v1091 = vsub.f32 2.0, %v1059
        %v1092 = vsub.f32 2.0, %v1060
        %v1093 = vmul.f32 %v997, %v1061
        %v1094 = vmul.f32 %v998, %v1062
        %v1095 = vmul.f32 %v999, %v1063
        %v1096 = vmul.f32 %v1000, %v1064
        %v1097 = vmul.f32 %v1001, %v1065
        %v1098 = vmul.f32 %v1002, %v1066
        %v1099 = vmul.f32 %v1003, %v1067
        %v1100 = vmul.f32 %v1004, %v1068
        %v1101 = vmul.f32 %v1005, %v1069
        %v1102 = vmul.f32 %v1006, %v1070
        %v1103 = vmul.f32 %v1007, %v1071
        %v1104 = vmul.f32 %v1008, %v1072
        %v1105 = vmul.f32 %v1009, %v1073
        %v1106 = vmul.f32 %v1010, %v1074
        %v1107 = vmul.f32 %v1011, %v1075
        %v1108 = vmul.f32 %v1012, %v1076
        %v1109 = vmul.f32 %v1013, %v1077
        %v1110 = vmul.f32 %v1014, %v1078
        %v1111 = vmul.f32 %v1015, %v1079
        %v1112 = vmul.f32 %v1016, %v1080
        %v1113 = vmul.f32 %v1017, %v1081
        %v1114 = vmul.f32 %v1018, %v1082
        %v1115 = vmul.f32 %v1019, %v1083
        %v1116 = vmul.f32 %v1020, %v1084
        %v1117 = vmul.f32 %v1021, %v1085
        %v1118 = vmul.f32 %v1022, %v1086
        %v1119 = vmul.f32 %v1023, %v1087
        %v1120 = vmul.f32 %v1024, %v1088
        %v1121 = vmul.f32 %v1025, %v1089
        %v1122 = vmul.f32 %v1026, %v1090
        %v1123 = vmul.f32 %v1027, %v1091
        %v1124 = vmul.f32 %v1028, %v1092
        %v1125 = vmul.f32 %v774, %v1093
        %v1126 = vmul.f32 %v776, %v1093
        %v1127 = vmul.f32 %v778, %v1094
        %v1128 = vmul.f32 %v780, %v1094
        %v1129 = vmul.f32 %v782, %v1095
        %v1130 = vmul.f32 %v784, %v1095
        %v1131 = vmul.f32 %v786, %v1096
        %v1132 = vmul.f32 %v788, %v1096
        %v1133 = vmul.f32 %v790, %v1097
        %v1134 = vmul.f32 %v792, %v1097
        %v1135 = vmul.f32 %v794, %v1098
        %v1136 = vmul.f32 %v796, %v1098
        %v1137 = vmul.f32 %v798, %v1099
        %v1138 = vmul.f32 %v800, %v1099
        %v1139 = vmul.f32 %v802, %v1100
        %v1140 = vmul.f32 %v804, %v1100
        %v1141 = vmul.f32 %v806, %v1101
        %v1142 = vmul.f32 %v808, %v1101
        %v1143 = vmul.f32 %v810, %v1102
        %v1144 = vmul.f32 %v812, %v1102
        %v1145 = vmul.f32 %v814, %v1103
        %v1146 = vmul.f32 %v816, %v1103
        %v1147 = vmul.f32 %v818, %v1104
        %v1148 = vmul.f32 %v820, %v1104
        %v1149 = vmul.f32 %v822, %v1105
        %v1150 = vmul.f32 %v824, %v1105
        %v1151 = vmul.f32 %v826, %v1106
        %v1152 = vmul.f32 %v828, %v1106
        %v1153 = vmul.f32 %v830, %v1107
        %v1154 = vmul.f32 %v832, %v1107
        %v1155 = vmul.f32 %v834, %v1108
        %v1156 = vmul.f32 %v836, %v1108
        %v1157 = vmul.f32 %v838, %v1109
        %v1158 = vmul.f32 %v840, %v1109
        %v1159 = vmul.f32 %v842, %v1110
        %v1160 = vmul.f32 %v844, %v1110
        %v1161 = vmul.f32 %v846, %v1111
        %v1162 = vmul.f32 %v848, %v1111
        %v1163 = vmul.f32 %v850, %v1112
        %v1164 = vmul.f32 %v852, %v1112
        %v1165 = vmul.f32 %v854, %v1113
        %v1166 = vmul.f32 %v856, %v1113
        %v1167 = vmul.f32 %v858, %v1114
        %v1168 = vmul.f32 %v860, %v1114
        %v1169 = vmul.f32 %v862, %v1115
        %v1170 = vmul.f32 %v864, %v1115
        %v1171 = vmul.f32 %v866, %v1116
        %v1172 = vmul.f32 %v868, %v1116
        %v1173 = vmul.f32 %v870, %v1117
        %v1174 = vmul.f32 %v872, %v1117
        %v1175 = vmul.f32 %v874, %v1118
        %v1176 = vmul.f32 %v876, %v1118
        %v1177 = vmul.f32 %v878, %v1119
        %v1178 = vmul.f32 %v880, %v1119
        %v1179 = vmul.f32 %v882, %v1120
        %v1180 = vmul.f32 %v884, %v1120
        %v1181 = vmul.f32 %v886, %v1121
        %v1182 = vmul.f32 %v888, %v1121
        %v1183 = vmul.f32 %v890, %v1122
        %v1184 = vmul.f32 %v892, %v1122
        %v1185 = vmul.f32 %v894, %v1123
        %v1186 = vmul.f32 %v896, %v1123
        %v1187 = vmul.f32 %v898, %v1124
        %v1188 = vmul.f32 %v900, %v1124
        %1189 = vst [vmem:[%s219] sm:$0xff] %v1125
        %1190 = vst [vmem:[%s219 + $0x8] sm:$0xff] %v1126
        %1191 = vst [vmem:[%s219 + $0x10] sm:$0xff] %v1127
        %1192 = vst [vmem:[%s219 + $0x18] sm:$0xff] %v1128
        %1193 = vst [vmem:[%s219 + $0x20] sm:$0xff] %v1129
        %1194 = vst [vmem:[%s219 + $0x28] sm:$0xff] %v1130
        %1195 = vst [vmem:[%s219 + $0x30] sm:$0xff] %v1131
        %1196 = vst [vmem:[%s219 + $0x38] sm:$0xff] %v1132
        %1197 = vst [vmem:[%s219 + $0x40] sm:$0xff] %v1133
        %1198 = vst [vmem:[%s219 + $0x48] sm:$0xff] %v1134
        %1199 = vst [vmem:[%s219 + $0x50] sm:$0xff] %v1135
        %1200 = vst [vmem:[%s219 + $0x58] sm:$0xff] %v1136
        %1201 = vst [vmem:[%s219 + $0x60] sm:$0xff] %v1137
        %1202 = vst [vmem:[%s219 + $0x68] sm:$0xff] %v1138
        %1203 = vst [vmem:[%s219 + $0x70] sm:$0xff] %v1139
        %1204 = vst [vmem:[%s219 + $0x78] sm:$0xff] %v1140
        %1205 = vst [vmem:[%s219 + $0x80] sm:$0xff] %v1141
        %1206 = vst [vmem:[%s219 + $0x88] sm:$0xff] %v1142
        %1207 = vst [vmem:[%s219 + $0x90] sm:$0xff] %v1143
        %1208 = vst [vmem:[%s219 + $0x98] sm:$0xff] %v1144
        %1209 = vst [vmem:[%s219 + $0xa0] sm:$0xff] %v1145
        %1210 = vst [vmem:[%s219 + $0xa8] sm:$0xff] %v1146
        %1211 = vst [vmem:[%s219 + $0xb0] sm:$0xff] %v1147
        %1212 = vst [vmem:[%s219 + $0xb8] sm:$0xff] %v1148
        %1213 = vst [vmem:[%s219 + $0xc0] sm:$0xff] %v1149
        %1214 = vst [vmem:[%s219 + $0xc8] sm:$0xff] %v1150
        %1215 = vst [vmem:[%s219 + $0xd0] sm:$0xff] %v1151
        %1216 = vst [vmem:[%s219 + $0xd8] sm:$0xff] %v1152
        %1217 = vst [vmem:[%s219 + $0xe0] sm:$0xff] %v1153
        %1218 = vst [vmem:[%s219 + $0xe8] sm:$0xff] %v1154
        %1219 = vst [vmem:[%s219 + $0xf0] sm:$0xff] %v1155
        %1220 = vst [vmem:[%s219 + $0xf8] sm:$0xff] %v1156
        %1221 = vst [vmem:[%s219 + $0x100] sm:$0xff] %v1157
        %1222 = vst [vmem:[%s219 + $0x108] sm:$0xff] %v1158
        %1223 = vst [vmem:[%s219 + $0x110] sm:$0xff] %v1159
        %1224 = vst [vmem:[%s219 + $0x118] sm:$0xff] %v1160
        %1225 = vst [vmem:[%s219 + $0x120] sm:$0xff] %v1161
        %1226 = vst [vmem:[%s219 + $0x128] sm:$0xff] %v1162
        %1227 = vst [vmem:[%s219 + $0x130] sm:$0xff] %v1163
        %1228 = vst [vmem:[%s219 + $0x138] sm:$0xff] %v1164
        %1229 = vst [vmem:[%s219 + $0x140] sm:$0xff] %v1165
        %1230 = vst [vmem:[%s219 + $0x148] sm:$0xff] %v1166
        %1231 = vst [vmem:[%s219 + $0x150] sm:$0xff] %v1167
        %1232 = vst [vmem:[%s219 + $0x158] sm:$0xff] %v1168
        %1233 = vst [vmem:[%s219 + $0x160] sm:$0xff] %v1169
        %1234 = vst [vmem:[%s219 + $0x168] sm:$0xff] %v1170
        %1235 = vst [vmem:[%s219 + $0x170] sm:$0xff] %v1171
        %1236 = vst [vmem:[%s219 + $0x178] sm:$0xff] %v1172
        %1237 = vst [vmem:[%s219 + $0x180] sm:$0xff] %v1173
        %1238 = vst [vmem:[%s219 + $0x188] sm:$0xff] %v1174
        %1239 = vst [vmem:[%s219 + $0x190] sm:$0xff] %v1175
        %1240 = vst [vmem:[%s219 + $0x198] sm:$0xff] %v1176
        %1241 = vst [vmem:[%s219 + $0x1a0] sm:$0xff] %v1177
        %1242 = vst [vmem:[%s219 + $0x1a8] sm:$0xff] %v1178
        %1243 = vst [vmem:[%s219 + $0x1b0] sm:$0xff] %v1179
        %1244 = vst [vmem:[%s219 + $0x1b8] sm:$0xff] %v1180
        %1245 = vst [vmem:[%s219 + $0x1c0] sm:$0xff] %v1181
        %1246 = vst [vmem:[%s219 + $0x1c8] sm:$0xff] %v1182
        %1247 = vst [vmem:[%s219 + $0x1d0] sm:$0xff] %v1183
        %1248 = vst [vmem:[%s219 + $0x1d8] sm:$0xff] %v1184
        %1249 = vst [vmem:[%s219 + $0x1e0] sm:$0xff] %v1185
        %1250 = vst [vmem:[%s219 + $0x1e8] sm:$0xff] %v1186
        %1251 = vst [vmem:[%s219 + $0x1f0] sm:$0xff] %v1187
        %1252 = vst [vmem:[%s219 + $0x1f8] sm:$0xff] %v1188
        %s1253 = sand.u32 %s98, 1
        %s1254 = scalar_lea.sflag [#allocation4], %s1253
        %s1255 = sand.u32 %s98, 1
        %s1256 = smul.addr %s1255, 512
        %s1257 = scalar_lea.vmem [#allocation7], %s1256
        // Predicated region
        $region37: #{tpu_custom_call.1} parent=27 // pred_check
          %p1258 = pneg %p108
        $region38: #{tpu_custom_call.1} parent=27 // pred_check_branch
          %1260 = sbr.rel (%p1258) target = $region40
        $region39: #{tpu_custom_call.1} parent=27 // pred_region
          %s1261 = smul.u32 32, %s27
          %1263 = vsyncadd %s1254, 0
          %s1264 = smul.addr %s1261, 2
          %s1265 = smul.addr %s26, 64
          %s1266 = sadd.s32 %s1264, %s1265
          %s1267 = smul.addr %s1266, 8
          %s1268 = scalar_lea.hbm %s2, %s1267
          %s1269 = sshll.u32 %s1257, 4
          %s1270 = int_to_ptr.vmem [resolvable:$true] %s1269
          %s1271 = sshll.u32 %s1268, 4
          %s1272 = int_to_ptr.hbm [resolvable:$true] %s1271
          %1277 = dma.vmem_to_hbm [thread:$0]  %s1270, 8192, %s1272, %s1254, 256, 256, 16
        $region40: #{tpu_custom_call.1} parent=27 // pred_fallthru
          _
      $region28: #{tpu_custom_call.1} parent=5 // pred_fallthru
        _
      %p1278 = scmp.le.s32.totalorder 2, %s17
      // Predicated region
      $region41: #{tpu_custom_call.1} parent=5 // pred_check
        %p1279 = pneg %p1278
      $region42: #{tpu_custom_call.1} parent=5 // pred_check_branch
        %1281 = sbr.rel (%p1279) target = $region44
      $region43: #{tpu_custom_call.1} parent=5 // pred_region
        %s1282 = ssub.s32 %s17, 2
        // Predicated region
        $region45: #{tpu_custom_call.1} parent=43 // pred_check
          %p1283 = pneg %p114
        $region46: #{tpu_custom_call.1} parent=43 // pred_check_branch
          %1285 = sbr.rel (%p1283) target = $region48
        $region47: #{tpu_custom_call.1} parent=43 // pred_region
          %s1286 = sand.u32 %s99, 1
          %s1287 = scalar_lea.sflag [#allocation4], %s1286
          %s1288 = sand.u32 %s99, 1
          %s1289 = smul.addr %s1288, 512
          %s1290 = scalar_lea.vmem [#allocation7], %s1289
          %1292 = dma.done %s1287, 8192
        $region48: #{tpu_custom_call.1} parent=43 // pred_fallthru
          _
      $region44: #{tpu_custom_call.1} parent=5 // pred_fallthru
        _
    $region6: #{tpu_custom_call.1} parent=1 // loop_footer
      %s21 = sadd.s32 1, %s17
    $region7: #{tpu_custom_call.1} parent=1 // loop_footer_branch
      %16 = sbr.rel target = $region3
    $region8: #{tpu_custom_call.1} parent=1 // loop_exit
      _
    %1293 = vsyncpa [#allocation3], 1
    %s1294 = scalar_lea.sflag [#allocation3], 1
    %1295 = vsyncpa %s1294, 1
    %1296 = vsyncpa [#allocation6], 1
    %s1297 = scalar_lea.sflag [#allocation6], 1
    %1298 = vsyncpa %s1297, 1
    %1299 = vsyncpa [#allocation4], 1
    %s1300 = scalar_lea.sflag [#allocation4], 1
    %1301 = vsyncpa %s1300, 1

</llo_original>
